<compile_context>
chip_gen: v7x
topology: tpu7x:2x2x1
jax: 0.10.0
libtpu: 0.0.40
codegen_flags: <defaults>
</compile_context>

<pallas_src>
import functools
import math

import jax
import jax.numpy as jnp
import numpy as np
from jax.experimental import pallas as pl
from jax.experimental.pallas import tpu as pltpu

_MIB = 1024 * 1024


def _round_up(x, m):
    return ((x + m - 1) // m) * m


def _cdiv(a, b):
    return -(-a // b)


# -----------------------------------------------------------------------------
# Host-side DFT constant matrices (cached per shape; float64 trig, f32 output).
# -----------------------------------------------------------------------------
@functools.lru_cache(maxsize=32)
def _fused_dft_matrix_np(H, W):
    """(H*W, round_up(2*H*Wf,128)): d_flat @ M = [Re(rfft2) | Im(rfft2)], zero-padded."""
    Wf = W // 2 + 1
    P = _round_up(2 * H * Wf, 128)
    h = np.arange(H, dtype=np.float64)
    w = np.arange(W, dtype=np.float64)
    u = np.arange(H, dtype=np.float64)
    v = np.arange(Wf, dtype=np.float64)
    theta = 2.0 * np.pi * (
        np.multiply.outer(h, u)[:, None, :, None] / H
        + np.multiply.outer(w, v)[None, :, None, :] / W)          # (H, W, H, Wf)
    m = np.zeros((H * W, P), np.float32)
    m[:, :H * Wf] = np.cos(theta).reshape(H * W, H * Wf)
    m[:, H * Wf:2 * H * Wf] = (-np.sin(theta)).reshape(H * W, H * Wf)
    return m


@functools.lru_cache(maxsize=32)
def _two_stage_dft_matrices_np(H, W):
    """mw: (W, 2*wfp) = [cos | -sin] (per-half lane pad);  mh: (2H, H) = [Ch; -Sh]."""
    Wf = W // 2 + 1
    wfp = _round_up(Wf, 128)
    w = np.arange(W, dtype=np.float64)
    v = np.arange(Wf, dtype=np.float64)
    ang_w = 2.0 * np.pi * np.multiply.outer(w, v) / W
    mw = np.zeros((W, 2 * wfp), np.float32)
    mw[:, :Wf] = np.cos(ang_w)
    mw[:, wfp:wfp + Wf] = -np.sin(ang_w)
    u = np.arange(H, dtype=np.float64)
    h = np.arange(H, dtype=np.float64)
    ang_h = 2.0 * np.pi * np.multiply.outer(u, h) / H
    mh = np.concatenate([np.cos(ang_h), -np.sin(ang_h)], axis=0).astype(np.float32)
    return mw, mh


# -----------------------------------------------------------------------------
# Kernels
# -----------------------------------------------------------------------------
def _fused_kernel(x_ref, g_ref, m_ref, out_ref, acc_ref, *, compute_dtype):
    # Zero the accumulator at the start of each core's tile loop.
    @pl.when(pl.program_id(1) == 0)
    def _():
        acc_ref[...] = jnp.zeros_like(acc_ref)

    d = x_ref[...].astype(jnp.float32) - g_ref[...].astype(jnp.float32)
    d = d.astype(compute_dtype)
    # One MXU matmul gives Re and Im of the full 2-D rfft for every slice.
    y = jnp.dot(d, m_ref[...], preferred_element_type=jnp.float32)
    acc_ref[...] += jnp.abs(y)                  # padded columns are exactly 0

    # Epilogue: single cross-lane reduce + scalar SMEM store per core.
    @pl.when(pl.program_id(1) == pl.num_programs(1) - 1)
    def _():
        out_ref[0, 0] = jnp.sum(acc_ref[...])


def _two_stage_kernel(x_ref, g_ref, mw_ref, mh_ref, out_ref, acc_ref,
                      *, tile_bc, H, wfp, compute_dtype):
    @pl.when(pl.program_id(1) == 0)
    def _():
        acc_ref[...] = jnp.zeros_like(acc_ref)

    d = x_ref[...].astype(jnp.float32) - g_ref[...].astype(jnp.float32)
    d = d.astype(compute_dtype)

    # Stage 1: W-axis real DFT of every row of every slice -- one big matmul.
    #   t[:, :wfp] = Re of the row rfft, t[:, wfp:] = Im.
    t = jnp.dot(d, mw_ref[...], preferred_element_type=jnp.float32)
    t = t.astype(compute_dtype)

    # Stage 2: H-axis DFT, dense (2H, H) matrix per slice (full-K matmuls,
    # no block-diagonal zero padding).
    mh = mh_ref[...]
    partial = jnp.zeros((H, wfp), jnp.float32)
    for b in range(tile_bc):
        tb = t[b * H:(b + 1) * H, :]                                  # (H, 2*wfp)
        z = jnp.dot(mh, tb, preferred_element_type=jnp.float32)      # (2H, 2*wfp)
        p = z[:H, :]          # [ Ch @ re | Ch @ im ]
        q = z[H:, :]          # [-Sh @ re | -Sh @ im ]
        yr = p[:, :wfp] - q[:, wfp:]      # Re(F) = Ch@re + Sh@im
        yi = p[:, wfp:] + q[:, :wfp]      # Im(F) = Ch@im - Sh@re
        partial = partial + jnp.abs(yr) + jnp.abs(yi)
    acc_ref[...] += partial

    @pl.when(pl.program_id(1) == pl.num_programs(1) - 1)
    def _():
        out_ref[0, 0] = jnp.sum(acc_ref[...])


# -----------------------------------------------------------------------------
# Wrapper
# -----------------------------------------------------------------------------
def _num_tensorcores():
    try:
        n = getattr(jax.devices()[0], "num_cores", 1)
        return max(1, min(2, int(n)))
    except Exception:
        return 1


def loss_freq_reco(imgs, gts, *, compute_dtype=jnp.float32,
                   tile_bc=None, num_parallel=None, force_two_stage=False):
    assert imgs.shape == gts.shape and imgs.ndim == 4
    B, C, H, W = map(int, imgs.shape)
    Wf = W // 2 + 1
    BC = B * C
    in_itemsize = np.dtype(imgs.dtype).itemsize
    comp_itemsize = np.dtype(compute_dtype).itemsize

    if num_parallel is None:
        num_parallel = _num_tensorcores()
    num_parallel = max(1, min(2, int(num_parallel)))

    # Path selection: fuse both DFT axes into one matrix when it fits VMEM.
    P_fused = _round_up(2 * H * Wf, 128)
    use_fused = (not force_two_stage) and (H * W * P_fused * comp_itemsize
                                           <= 6 * _MIB)

    target_block_bytes = 2 * _MIB               # streamed bytes / input / step
    per_slice_bytes = H * W * in_itemsize

    if use_fused:
        if tile_bc is None:
            tile_bc = max(1, min(BC, target_block_bytes // max(per_slice_bytes, 1)))
        tile_bc = int(_round_up(int(tile_bc), 8))         # sublane-aligned M
        if tile_bc >= 256:
            tile_bc = (tile_bc // 256) * 256              # MXU-dim aligned M
    else:
        if tile_bc is None:
            tile_bc = max(1, min(BC, target_block_bytes // max(per_slice_bytes, 1), 16))
        step = 8 // math.gcd(H, 8)                        # tile_bc*H % 8 == 0
        tile_bc = int(_round_up(int(tile_bc), step))

    tiles_total = _cdiv(BC, tile_bc)
    num_par = max(1, min(num_parallel, tiles_total))
    tiles_per_core = _cdiv(tiles_total, num_par)
    bc_pad = num_par * tiles_per_core * tile_bc           # zero slices add 0

    if use_fused:
        x = imgs.reshape(BC, H * W)
        g = gts.reshape(BC, H * W)
        if bc_pad != BC:
            x = jnp.pad(x, ((0, bc_pad - BC), (0, 0)))
            g = jnp.pad(g, ((0, bc_pad - BC), (0, 0)))
        m = jnp.asarray(_fused_dft_matrix_np(H, W), dtype=compute_dtype)
        kernel = functools.partial(_fused_kernel, compute_dtype=compute_dtype)
        in_specs = [
            pl.BlockSpec((tile_bc, H * W),
                         lambda c, i: (c * tiles_per_core + i, 0)),
            pl.BlockSpec((tile_bc, H * W),
                         lambda c, i: (c * tiles_per_core + i, 0)),
            # Constant operand: single-buffered, DMA'd once.
            pl.BlockSpec((H * W, P_fused), lambda c, i: (0, 0),
                         pipeline_mode=pl.Buffered(1)),
        ]
        scratch = [pltpu.VMEM((tile_bc, P_fused), jnp.float32)]
        operands = (x, g, m)
        est = (2 * 2 * tile_bc * H * W * in_itemsize
               + H * W * P_fused * comp_itemsize
               + tile_bc * P_fused * 4
               + 3 * tile_bc * max(H * W, P_fused) * 4)
    else:
        wfp = _round_up(Wf, 128)
        x = imgs.reshape(BC, H, W)
        g = gts.reshape(BC, H, W)
        if bc_pad != BC:
            x = jnp.pad(x, ((0, bc_pad - BC), (0, 0), (0, 0)))
            g = jnp.pad(g, ((0, bc_pad - BC), (0, 0), (0, 0)))
        x = x.reshape(bc_pad * H, W)
        g = g.reshape(bc_pad * H, W)
        mw_np, mh_np = _two_stage_dft_matrices_np(H, W)
        mw = jnp.asarray(mw_np, dtype=compute_dtype)
        mh = jnp.asarray(mh_np, dtype=compute_dtype)
        kernel = functools.partial(_two_stage_kernel, tile_bc=tile_bc, H=H,
                                   wfp=wfp, compute_dtype=compute_dtype)
        in_specs = [
            pl.BlockSpec((tile_bc * H, W),
                         lambda c, i: (c * tiles_per_core + i, 0)),
            pl.BlockSpec((tile_bc * H, W),
                         lambda c, i: (c * tiles_per_core + i, 0)),
            pl.BlockSpec((W, 2 * wfp), lambda c, i: (0, 0),
                         pipeline_mode=pl.Buffered(1)),
            pl.BlockSpec((2 * H, H), lambda c, i: (0, 0),
                         pipeline_mode=pl.Buffered(1)),
        ]
        scratch = [pltpu.VMEM((H, wfp), jnp.float32)]
        operands = (x, g, mw, mh)
        est = (2 * 2 * tile_bc * H * W * in_itemsize
               + (W * 2 * wfp + 2 * H * H) * comp_itemsize
               + H * wfp * 4
               + 2 * tile_bc * H * 2 * wfp * 4
               + 2 * H * 2 * wfp * 4)

    vmem_limit = int(min(max(est + 16 * _MIB, 32 * _MIB), 56 * _MIB))

    partials = pl.pallas_call(
        kernel,
        out_shape=jax.ShapeDtypeStruct((num_par, 1), jnp.float32),
        grid_spec=pltpu.PrefetchScalarGridSpec(
            num_scalar_prefetch=0,
            grid=(num_par, tiles_per_core),
            in_specs=in_specs,
            out_specs=pl.BlockSpec((1, 1), lambda c, i: (c, 0),
                                   memory_space=pltpu.SMEM),
            scratch_shapes=scratch,
        ),
        compiler_params=pltpu.CompilerParams(
            dimension_semantics=("parallel", "arbitrary"),
            vmem_limit_bytes=vmem_limit),
    )(*operands)

    # L1 mean over the concatenated (B, 2C, H, Wf) tensor (true Wf, not padded).
    count = B * 2 * C * H * Wf
    return jnp.sum(partials) / jnp.float32(count)


def _reference(imgs, gts):
    fi = jnp.fft.rfftn(imgs.astype(jnp.float32), axes=(2, 3))
    fg = jnp.fft.rfftn(gts.astype(jnp.float32), axes=(2, 3))
    ci = jnp.concatenate([fi.real, fi.imag], axis=1)
    cg = jnp.concatenate([fg.real, fg.imag], axis=1)
    return jnp.mean(jnp.abs(ci - cg))


if __name__ == "__main__":
    key = jax.random.PRNGKey(0)
    k1, k2 = jax.random.split(key)
    B, C, H, W = 2, 4, 16, 16
    imgs = jax.random.normal(k1, (B, C, H, W), dtype=jnp.float32)
    gts = jax.random.normal(k2, (B, C, H, W), dtype=jnp.float32)

    ref = jax.block_until_ready(_reference(imgs, gts))

    # 1) Fused single-matmul path (default for small images), f32 MXU operands.
    out_fused = jax.block_until_ready(loss_freq_reco(imgs, gts))
    np.testing.assert_allclose(np.asarray(out_fused), np.asarray(ref),
                               rtol=1e-4, atol=1e-4)

    # 2) Two-stage path (used for large images), forced here for validation.
    out_two = jax.block_until_ready(
        loss_freq_reco(imgs, gts, force_two_stage=True))
    np.testing.assert_allclose(np.asarray(out_two), np.asarray(ref),
                               rtol=1e-4, atol=1e-4)

    # 3) bf16 MXU-operand perf option (accumulation stays f32).
    out_bf16 = jax.block_until_ready(
        loss_freq_reco(imgs, gts, compute_dtype=jnp.bfloat16))
    np.testing.assert_allclose(np.asarray(out_bf16), np.asarray(ref),
                               rtol=3e-2, atol=3e-2)

    print("KERNEL_OK")
</pallas_src>

<mosaic_0001>
module attributes {stable_mosaic.version = 11 : i64} {
  func.func @_fused_kernel(%arg0: i32, %arg1: i32, %arg2: memref<8x256xf32, #tpu.memory_space<vmem>>, %arg3: memref<8x256xf32, #tpu.memory_space<vmem>>, %arg4: memref<256x384xf32, #tpu.memory_space<vmem>>, %arg5: memref<1x1xf32, #tpu.memory_space<smem>>, %arg6: memref<8x384xf32, #tpu.memory_space<vmem>>) attributes {dimension_semantics = [#tpu.dimension_semantics<parallel>, #tpu.dimension_semantics<arbitrary>], iteration_bounds = array<i64: 1, 1>, scalar_prefetch = 0 : i64, scratch_operands = 1 : i64, tpu.core_type = #tpu.core_type<tc>, window_params = [{transform_indices = @transform_0, window_bounds = array<i64: 8, 256>}, {transform_indices = @transform_1, window_bounds = array<i64: 8, 256>}, {pipeline_mode = #tpu.pipeline_mode<synchronous>, transform_indices = @transform_2, window_bounds = array<i64: 256, 384>}, {transform_indices = @transform_3, window_bounds = array<i64: 1, 1>}]} {
    %c0_i32 = arith.constant 0 : i32
    %0 = arith.cmpi eq, %arg1, %c0_i32 : i32
    %1 = arith.extui %0 : i1 to i32
    %c0_i32_0 = arith.constant 0 : i32
    %2 = arith.cmpi ne, %1, %c0_i32_0 : i32
    scf.if %2 {
      %cst_12 = arith.constant 0.000000e+00 : f32
      %15 = vector.broadcast %cst_12 : f32 to vector<8x384xf32>
      %c0_13 = arith.constant 0 : index
      %c0_14 = arith.constant 0 : index
      %16 = vector.load %arg6[%c0_13, %c0_14] : memref<8x384xf32, #tpu.memory_space<vmem>>, vector<8x384xf32>
      tpu.vector_store %arg6[%c0_13, %c0_14], %15 {strides = array<i32>} : memref<8x384xf32, #tpu.memory_space<vmem>>, vector<8x384xf32>,
    } else {
    }
    %c0 = arith.constant 0 : index
    %c0_1 = arith.constant 0 : index
    %3 = vector.load %arg2[%c0, %c0_1] : memref<8x256xf32, #tpu.memory_space<vmem>>, vector<8x256xf32>
    %c0_2 = arith.constant 0 : index
    %c0_3 = arith.constant 0 : index
    %4 = vector.load %arg3[%c0_2, %c0_3] : memref<8x256xf32, #tpu.memory_space<vmem>>, vector<8x256xf32>
    %5 = arith.subf %3, %4 : vector<8x256xf32>
    %c0_4 = arith.constant 0 : index
    %c0_5 = arith.constant 0 : index
    %6 = vector.load %arg4[%c0_4, %c0_5] : memref<256x384xf32, #tpu.memory_space<vmem>>, vector<256x384xf32>
    %cst = arith.constant dense<0.000000e+00> : vector<8x384xf32>
    %7 = tpu.matmul %5, %6, %cst {dimension_numbers = #tpu.dot_dimension_numbers<[1], [0], [0], [1], [0, 0, 1, 1], [], []>} : vector<8x256xf32>, vector<256x384xf32>, vector<8x384xf32> -> vector<8x384xf32>
    %c0_6 = arith.constant 0 : index
    %c0_7 = arith.constant 0 : index
    %8 = vector.load %arg6[%c0_6, %c0_7] : memref<8x384xf32, #tpu.memory_space<vmem>>, vector<8x384xf32>
    %9 = math.absf %7 : vector<8x384xf32>
    %10 = arith.addf %8, %9 : vector<8x384xf32>
    %c0_8 = arith.constant 0 : index
    %c0_9 = arith.constant 0 : index
    %11 = vector.load %arg6[%c0_8, %c0_9] : memref<8x384xf32, #tpu.memory_space<vmem>>, vector<8x384xf32>
    tpu.vector_store %arg6[%c0_8, %c0_9], %10 {strides = array<i32>} : memref<8x384xf32, #tpu.memory_space<vmem>>, vector<8x384xf32>,
    %c0_i32_10 = arith.constant 0 : i32
    %12 = arith.cmpi eq, %arg1, %c0_i32_10 : i32
    %13 = arith.extui %12 : i1 to i32
    %c0_i32_11 = arith.constant 0 : i32
    %14 = arith.cmpi ne, %13, %c0_i32_11 : i32
    scf.if %14 {
      %c0_12 = arith.constant 0 : index
      %c0_13 = arith.constant 0 : index
      %15 = vector.load %arg6[%c0_12, %c0_13] : memref<8x384xf32, #tpu.memory_space<vmem>>, vector<8x384xf32>
      %16 = vector.shape_cast %15 : vector<8x384xf32> to vector<1x8x384xf32>
      %cst_14 = arith.constant dense<0.000000e+00> : vector<1xf32>
      %17 = vector.multi_reduction <add>, %16, %cst_14 [1, 2] : vector<1x8x384xf32> to vector<1xf32>
      %18 = vector.shape_cast %17 : vector<1xf32> to vector<1x1x1xf32>
      %19 = vector.extract %18[0, 0, 0] : f32 from vector<1x1x1xf32>
      %c0_15 = arith.constant 0 : index
      %c0_16 = arith.constant 0 : index
      %20 = memref.load %arg5[%c0_15, %c0_16] : memref<1x1xf32, #tpu.memory_space<smem>>
      memref.store %19, %arg5[%c0_15, %c0_16] : memref<1x1xf32, #tpu.memory_space<smem>>
    } else {
    }
    return
  }
  func.func @transform_0(%arg0: i32, %arg1: i32) -> (i32, i32) {
    %c1_i32 = arith.constant 1 : i32
    %0 = arith.muli %arg0, %c1_i32 : i32
    %1 = arith.addi %0, %arg1 : i32
    %c0_i32 = arith.constant 0 : i32
    %c0_i32_0 = arith.constant 0 : i32
    return %1, %c0_i32 : i32, i32
  }
  func.func @transform_1(%arg0: i32, %arg1: i32) -> (i32, i32) {
    %c1_i32 = arith.constant 1 : i32
    %0 = arith.muli %arg0, %c1_i32 : i32
    %1 = arith.addi %0, %arg1 : i32
    %c0_i32 = arith.constant 0 : i32
    %c0_i32_0 = arith.constant 0 : i32
    return %1, %c0_i32 : i32, i32
  }
  func.func @transform_2(%arg0: i32, %arg1: i32) -> (i32, i32) {
    %c0_i32 = arith.constant 0 : i32
    %c0_i32_0 = arith.constant 0 : i32
    %c0_i32_1 = arith.constant 0 : i32
    return %c0_i32, %c0_i32_0 : i32, i32
  }
  func.func @transform_3(%arg0: i32, %arg1: i32) -> (i32, i32) {
    %c0_i32 = arith.constant 0 : i32
    %c0_i32_0 = arith.constant 0 : i32
    return %arg0, %c0_i32 : i32, i32
  }
}

</mosaic_0001>

<llo_original>
// kernel: tpu_custom_call.1
$region0: #{tpu_custom_call.1}
  #allocation0 [shape = 'u32[]', space=smem, size = 0x4, offset = 0x4, fixed_abs, tag = 'smem constant byte address 0x4 - core index']
  #allocation1 [shape = 'u32[144,128]{1,0:T(1,128)}', space=vmem, size = 0x12000, scoped, tag = 'internal scratch']
  #allocation2 [shape = 'f32[8,384]{1,0:T(8,128)}', space=vmem, size = 0x3000, scoped, tag = 'scratch operand']
  %s0 = inlined_call_operand.hbm [shape: f32[8,256], index: 0, kind: input, shape index: {}]
  %s1 = inlined_call_operand.hbm [shape: f32[8,256], index: 1, kind: input, shape index: {}]
  %s2 = inlined_call_operand.hbm [shape: f32[256,384], index: 2, kind: input, shape index: {}]
  %s3 = inlined_call_operand.hbm [shape: f32[1,1], index: 3, kind: output, shape index: {}]
  %s4 = sld [smem:[#allocation0]]
  $region42: #{tpu_custom_call.1} parent=0
    _
  %s6 = ssub.s32 1, %s4
  %s7 = scalar_select 0, %s6, %s4
  $region1: #{tpu_custom_call.1} parent=0
    #allocation3 [shape = 'u8[8192]{0}', space=vmem, size = 0x2000, scoped, tag = 'input window, operand 0, single buffered']
    #allocation4 [shape = 's32[1]{0}', space=sflag, size = 0x4, scoped, tag = 'scoped memory for tpu_custom_call.1']
    #allocation5 [shape = 's32[1]{0}', space=sflag, size = 0x4, scoped, tag = 'scoped memory for tpu_custom_call.1']
    #allocation6 [shape = 'u8[8192]{0}', space=vmem, size = 0x2000, scoped, tag = 'input window, operand 1, single buffered']
    #allocation7 [shape = 's32[1]{0}', space=sflag, size = 0x4, scoped, tag = 'scoped memory for tpu_custom_call.1']
    #allocation8 [shape = 'u8[393216]{0}', space=vmem, size = 0x60000, scoped, tag = 'input window, operand 2, single buffered']
    #allocation9 [shape = 'u8[512]{0}', space=smem, size = 0x200, scoped, tag = 'output window, operand 0, single buffered']
    %8 = vsyncpa [#allocation4], 0
    %9 = vsyncpa [#allocation7], 0
    %10 = vsyncpa [#allocation5], 0
    // Predicated region
    $region2: #{tpu_custom_call.1} parent=1 // pred_check
      _
    $region3: #{tpu_custom_call.1} parent=1 // pred_check_branch
      %12 = sbr.rel (0) target = $region5
    $region4: #{tpu_custom_call.1} parent=1 // pred_region
      %s13 = sadd.s32 0, 0
      %s15 = ssub.s32 256, 256
      %16 = vsyncadd [#allocation4], %s15
      %s17 = smul.addr %s13, 2
      %s18 = smul.addr %s17, 128
      %s19 = scalar_lea.hbm %s0, %s18
      %s21 = sshll.u32 [#allocation3], 4
      %s22 = int_to_ptr.vmem [resolvable:$true] %s21
      %24 = dma.hbm_to_vmem [thread:$0]  %s19, 256, %s22, [#allocation4]
    $region5: #{tpu_custom_call.1} parent=1 // pred_fallthru
      _
    // Predicated region
    $region6: #{tpu_custom_call.1} parent=1 // pred_check
      _
    $region7: #{tpu_custom_call.1} parent=1 // pred_check_branch
      %26 = sbr.rel (0) target = $region9
    $region8: #{tpu_custom_call.1} parent=1 // pred_region
      %s27 = sadd.s32 0, 0
      %s29 = ssub.s32 256, 256
      %30 = vsyncadd [#allocation7], %s29
      %s31 = smul.addr %s27, 2
      %s32 = smul.addr %s31, 128
      %s33 = scalar_lea.hbm %s1, %s32
      %s35 = sshll.u32 [#allocation6], 4
      %s36 = int_to_ptr.vmem [resolvable:$true] %s35
      %38 = dma.hbm_to_vmem [thread:$0]  %s33, 256, %s36, [#allocation7]
    $region9: #{tpu_custom_call.1} parent=1 // pred_fallthru
      _
    // Predicated region
    $region10: #{tpu_custom_call.1} parent=1 // pred_check
      _
    $region11: #{tpu_custom_call.1} parent=1 // pred_check_branch
      %40 = sbr.rel (0) target = $region13
    $region12: #{tpu_custom_call.1} parent=1 // pred_region
      %s42 = ssub.s32 12288, 12288
      %43 = vsyncadd [#allocation7], %s42
      %s44 = sshll.u32 [#allocation8], 4
      %s45 = int_to_ptr.vmem [resolvable:$true] %s44
      %50 = dma.hbm_to_vmem [thread:$0]  %s2, 12288, %s45, [#allocation7], 384, 384, 24
    $region13: #{tpu_custom_call.1} parent=1 // pred_fallthru
      _
    // Predicated region
    $region14: #{tpu_custom_call.1} parent=1 // pred_check
      _
    $region15: #{tpu_custom_call.1} parent=1 // pred_check_branch
      %52 = sbr.rel (0) target = $region17
    $region16: #{tpu_custom_call.1} parent=1 // pred_region
      %53 = dma.done [#allocation4], 256
    $region17: #{tpu_custom_call.1} parent=1 // pred_fallthru
      _
    // Predicated region
    $region18: #{tpu_custom_call.1} parent=1 // pred_check
      _
    $region19: #{tpu_custom_call.1} parent=1 // pred_check_branch
      %55 = sbr.rel (0) target = $region21
    $region20: #{tpu_custom_call.1} parent=1 // pred_region
      %56 = dma.done [#allocation7], 256
    $region21: #{tpu_custom_call.1} parent=1 // pred_fallthru
      _
    // Predicated region
    $region22: #{tpu_custom_call.1} parent=1 // pred_check
      _
    $region23: #{tpu_custom_call.1} parent=1 // pred_check_branch
      %58 = sbr.rel (0) target = $region25
    $region24: #{tpu_custom_call.1} parent=1 // pred_region
      %59 = dma.done [#allocation7], 12288
    $region25: #{tpu_custom_call.1} parent=1 // pred_fallthru
      _
    %s60 = sadd.s32 0, 0
    %s61 = sadd.s32 0, 0
    %p62 = scmp.eq.s32.totalorder 0, 0
    // Predicated region
    $region26: #{tpu_custom_call.1} parent=1 // pred_check
      %p63 = pneg %p62
    $region27: #{tpu_custom_call.1} parent=1 // pred_check_branch
      %65 = sbr.rel (%p63) target = $region29
    $region28: #{tpu_custom_call.1} parent=1 // pred_region
      %66 = vst [vmem:[#allocation2] sm:$0xff] 0.0
      %67 = vst [vmem:[#allocation2 + $0x8] sm:$0xff] 0.0
      %68 = vst [vmem:[#allocation2 + $0x10] sm:$0xff] 0.0
    $region29: #{tpu_custom_call.1} parent=1 // pred_fallthru
      _
    %v69 = vld [vmem:[#allocation3] sm:$0xff]
    %v70 = vld [vmem:[#allocation3 + $0x8] sm:$0xff]
    %v71 = vld [vmem:[#allocation6] sm:$0xff]
    %v72 = vld [vmem:[#allocation6 + $0x8] sm:$0xff]
    %v73 = vsub.f32 %v69, %v71
    %v74 = vsub.f32 %v70, %v72
    %v75 = vld [vmem:[#allocation8] sm:$0xff]
    %v76 = vld [vmem:[#allocation8 + $0x8] sm:$0xff]
    %v77 = vld [vmem:[#allocation8 + $0x10] sm:$0xff]
    %v78 = vld [vmem:[#allocation8 + $0x18] sm:$0xff]
    %v79 = vld [vmem:[#allocation8 + $0x20] sm:$0xff]
    %v80 = vld [vmem:[#allocation8 + $0x28] sm:$0xff]
    %v81 = vld [vmem:[#allocation8 + $0x30] sm:$0xff]
    %v82 = vld [vmem:[#allocation8 + $0x38] sm:$0xff]
    %v83 = vld [vmem:[#allocation8 + $0x40] sm:$0xff]
    %v84 = vld [vmem:[#allocation8 + $0x48] sm:$0xff]
    %v85 = vld [vmem:[#allocation8 + $0x50] sm:$0xff]
    %v86 = vld [vmem:[#allocation8 + $0x58] sm:$0xff]
    %v87 = vld [vmem:[#allocation8 + $0x60] sm:$0xff]
    %v88 = vld [vmem:[#allocation8 + $0x68] sm:$0xff]
    %v89 = vld [vmem:[#allocation8 + $0x70] sm:$0xff]
    %v90 = vld [vmem:[#allocation8 + $0x78] sm:$0xff]
    %v91 = vld [vmem:[#allocation8 + $0x80] sm:$0xff]
    %v92 = vld [vmem:[#allocation8 + $0x88] sm:$0xff]
    %v93 = vld [vmem:[#allocation8 + $0x90] sm:$0xff]
    %v94 = vld [vmem:[#allocation8 + $0x98] sm:$0xff]
    %v95 = vld [vmem:[#allocation8 + $0xa0] sm:$0xff]
    %v96 = vld [vmem:[#allocation8 + $0xa8] sm:$0xff]
    %v97 = vld [vmem:[#allocation8 + $0xb0] sm:$0xff]
    %v98 = vld [vmem:[#allocation8 + $0xb8] sm:$0xff]
    %v99 = vld [vmem:[#allocation8 + $0xc0] sm:$0xff]
    %v100 = vld [vmem:[#allocation8 + $0xc8] sm:$0xff]
    %v101 = vld [vmem:[#allocation8 + $0xd0] sm:$0xff]
    %v102 = vld [vmem:[#allocation8 + $0xd8] sm:$0xff]
    %v103 = vld [vmem:[#allocation8 + $0xe0] sm:$0xff]
    %v104 = vld [vmem:[#allocation8 + $0xe8] sm:$0xff]
    %v105 = vld [vmem:[#allocation8 + $0xf0] sm:$0xff]
    %v106 = vld [vmem:[#allocation8 + $0xf8] sm:$0xff]
    %v107 = vld [vmem:[#allocation8 + $0x100] sm:$0xff]
    %v108 = vld [vmem:[#allocation8 + $0x108] sm:$0xff]
    %v109 = vld [vmem:[#allocation8 + $0x110] sm:$0xff]
    %v110 = vld [vmem:[#allocation8 + $0x118] sm:$0xff]
    %v111 = vld [vmem:[#allocation8 + $0x120] sm:$0xff]
    %v112 = vld [vmem:[#allocation8 + $0x128] sm:$0xff]
    %v113 = vld [vmem:[#allocation8 + $0x130] sm:$0xff]
    %v114 = vld [vmem:[#allocation8 + $0x138] sm:$0xff]
    %v115 = vld [vmem:[#allocation8 + $0x140] sm:$0xff]
    %v116 = vld [vmem:[#allocation8 + $0x148] sm:$0xff]
    %v117 = vld [vmem:[#allocation8 + $0x150] sm:$0xff]
    %v118 = vld [vmem:[#allocation8 + $0x158] sm:$0xff]
    %v119 = vld [vmem:[#allocation8 + $0x160] sm:$0xff]
    %v120 = vld [vmem:[#allocation8 + $0x168] sm:$0xff]
    %v121 = vld [vmem:[#allocation8 + $0x170] sm:$0xff]
    %v122 = vld [vmem:[#allocation8 + $0x178] sm:$0xff]
    %v123 = vld [vmem:[#allocation8 + $0x180] sm:$0xff]
    %v124 = vld [vmem:[#allocation8 + $0x188] sm:$0xff]
    %v125 = vld [vmem:[#allocation8 + $0x190] sm:$0xff]
    %v126 = vld [vmem:[#allocation8 + $0x198] sm:$0xff]
    %v127 = vld [vmem:[#allocation8 + $0x1a0] sm:$0xff]
    %v128 = vld [vmem:[#allocation8 + $0x1a8] sm:$0xff]
    %v129 = vld [vmem:[#allocation8 + $0x1b0] sm:$0xff]
    %v130 = vld [vmem:[#allocation8 + $0x1b8] sm:$0xff]
    %v131 = vld [vmem:[#allocation8 + $0x1c0] sm:$0xff]
    %v132 = vld [vmem:[#allocation8 + $0x1c8] sm:$0xff]
    %v133 = vld [vmem:[#allocation8 + $0x1d0] sm:$0xff]
    %v134 = vld [vmem:[#allocation8 + $0x1d8] sm:$0xff]
    %v135 = vld [vmem:[#allocation8 + $0x1e0] sm:$0xff]
    %v136 = vld [vmem:[#allocation8 + $0x1e8] sm:$0xff]
    %v137 = vld [vmem:[#allocation8 + $0x1f0] sm:$0xff]
    %v138 = vld [vmem:[#allocation8 + $0x1f8] sm:$0xff]
    %v139 = vld [vmem:[#allocation8 + $0x200] sm:$0xff]
    %v140 = vld [vmem:[#allocation8 + $0x208] sm:$0xff]
    %v141 = vld [vmem:[#allocation8 + $0x210] sm:$0xff]
    %v142 = vld [vmem:[#allocation8 + $0x218] sm:$0xff]
    %v143 = vld [vmem:[#allocation8 + $0x220] sm:$0xff]
    %v144 = vld [vmem:[#allocation8 + $0x228] sm:$0xff]
    %v145 = vld [vmem:[#allocation8 + $0x230] sm:$0xff]
    %v146 = vld [vmem:[#allocation8 + $0x238] sm:$0xff]
    %v147 = vld [vmem:[#allocation8 + $0x240] sm:$0xff]
    %v148 = vld [vmem:[#allocation8 + $0x248] sm:$0xff]
    %v149 = vld [vmem:[#allocation8 + $0x250] sm:$0xff]
    %v150 = vld [vmem:[#allocation8 + $0x258] sm:$0xff]
    %v151 = vld [vmem:[#allocation8 + $0x260] sm:$0xff]
    %v152 = vld [vmem:[#allocation8 + $0x268] sm:$0xff]
    %v153 = vld [vmem:[#allocation8 + $0x270] sm:$0xff]
    %v154 = vld [vmem:[#allocation8 + $0x278] sm:$0xff]
    %v155 = vld [vmem:[#allocation8 + $0x280] sm:$0xff]
    %v156 = vld [vmem:[#allocation8 + $0x288] sm:$0xff]
    %v157 = vld [vmem:[#allocation8 + $0x290] sm:$0xff]
    %v158 = vld [vmem:[#allocation8 + $0x298] sm:$0xff]
    %v159 = vld [vmem:[#allocation8 + $0x2a0] sm:$0xff]
    %v160 = vld [vmem:[#allocation8 + $0x2a8] sm:$0xff]
    %v161 = vld [vmem:[#allocation8 + $0x2b0] sm:$0xff]
    %v162 = vld [vmem:[#allocation8 + $0x2b8] sm:$0xff]
    %v163 = vld [vmem:[#allocation8 + $0x2c0] sm:$0xff]
    %v164 = vld [vmem:[#allocation8 + $0x2c8] sm:$0xff]
    %v165 = vld [vmem:[#allocation8 + $0x2d0] sm:$0xff]
    %v166 = vld [vmem:[#allocation8 + $0x2d8] sm:$0xff]
    %v167 = vld [vmem:[#allocation8 + $0x2e0] sm:$0xff]
    %v168 = vld [vmem:[#allocation8 + $0x2e8] sm:$0xff]
    %v169 = vld [vmem:[#allocation8 + $0x2f0] sm:$0xff]
    %v170 = vld [vmem:[#allocation8 + $0x2f8] sm:$0xff]
    %171 = vmatprep.subr.mxu0 %v76
    %172 = vmatpush1.msra.mxu0 %v75
    %173 = vmatprep.subr.mxu0 %v79
    %174 = vmatpush1.msra.mxu0 %v78
    %175 = vmatprep.subr.mxu0 %v82
    %176 = vmatpush1.msra.mxu0 %v81
    %177 = vmatprep.subr.mxu0 %v85
    %178 = vmatpush1.msra.mxu0 %v84
    %179 = vmatprep.subr.mxu0 %v88
    %180 = vmatpush1.msra.mxu0 %v87
    %181 = vmatprep.subr.mxu0 %v91
    %182 = vmatpush1.msra.mxu0 %v90
    %183 = vmatprep.subr.mxu0 %v94
    %184 = vmatpush1.msra.mxu0 %v93
    %185 = vmatprep.subr.mxu0 %v97
    %186 = vmatpush1.msra.mxu0 %v96
    %187 = vmatprep.subr.mxu0 %v100
    %188 = vmatpush1.msra.mxu0 %v99
    %189 = vmatprep.subr.mxu0 %v103
    %190 = vmatpush1.msra.mxu0 %v102
    %191 = vmatprep.subr.mxu0 %v106
    %192 = vmatpush1.msra.mxu0 %v105
    %193 = vmatprep.subr.mxu0 %v109
    %194 = vmatpush1.msra.mxu0 %v108
    %195 = vmatprep.subr.mxu0 %v112
    %196 = vmatpush1.msra.mxu0 %v111
    %197 = vmatprep.subr.mxu0 %v115
    %198 = vmatpush1.msra.mxu0 %v114
    %199 = vmatprep.subr.mxu0 %v118
    %200 = vmatpush1.msra.mxu0 %v117
    %201 = vmatprep.subr.mxu0 %v121
    %202 = vmatpush1.msra.mxu0 %v120
    %203 = vmatprep.subr.mxu0 %v124
    %204 = vmatpush1.msra.mxu0 %v123
    %205 = vmatprep.subr.mxu0 %v127
    %206 = vmatpush1.msra.mxu0 %v126
    %207 = vmatprep.subr.mxu0 %v130
    %208 = vmatpush1.msra.mxu0 %v129
    %209 = vmatprep.subr.mxu0 %v133
    %210 = vmatpush1.msra.mxu0 %v132
    %211 = vmatprep.subr.mxu0 %v136
    %212 = vmatpush1.msra.mxu0 %v135
    %213 = vmatprep.subr.mxu0 %v139
    %214 = vmatpush1.msra.mxu0 %v138
    %215 = vmatprep.subr.mxu0 %v142
    %216 = vmatpush1.msra.mxu0 %v141
    %217 = vmatprep.subr.mxu0 %v145
    %218 = vmatpush1.msra.mxu0 %v144
    %219 = vmatprep.subr.mxu0 %v148
    %220 = vmatpush1.msra.mxu0 %v147
    %221 = vmatprep.subr.mxu0 %v151
    %222 = vmatpush1.msra.mxu0 %v150
    %223 = vmatprep.subr.mxu0 %v154
    %224 = vmatpush1.msra.mxu0 %v153
    %225 = vmatprep.subr.mxu0 %v157
    %226 = vmatpush1.msra.mxu0 %v156
    %227 = vmatprep.subr.mxu0 %v160
    %228 = vmatpush1.msra.mxu0 %v159
    %229 = vmatprep.subr.mxu0 %v163
    %230 = vmatpush1.msra.mxu0 %v162
    %231 = vmatprep.subr.mxu0 %v166
    %232 = vmatpush1.msra.mxu0 %v165
    %233 = vmatprep.subr.mxu0 %v169
    %234 = vmatpush1.msra.mxu0 %v168
    %235 = vmatprep.mubr.f32.mxu0 %v74
    %236 = vmatmul.mubr.f32.gmra.mrb[0].mxu0 %v73
    %v237 = vpop.f32.mrb[0].mxu0
    %v238 = vadd.f32 0.0, %v237
    %v239 = vpop.f32.mrb[0].mxu0
    %v240 = vadd.f32 0.0, %v239
    %241 = vdwg.mxu0
    %242 = vmatprep.subr.mxu0 0.0
    %243 = vmatpush1.msra.mxu0 %v77
    %244 = vmatprep.subr.mxu0 0.0
    %245 = vmatpush1.msra.mxu0 %v80
    %246 = vmatprep.subr.mxu0 0.0
    %247 = vmatpush1.msra.mxu0 %v83
    %248 = vmatprep.subr.mxu0 0.0
    %249 = vmatpush1.msra.mxu0 %v86
    %250 = vmatprep.subr.mxu0 0.0
    %251 = vmatpush1.msra.mxu0 %v89
    %252 = vmatprep.subr.mxu0 0.0
    %253 = vmatpush1.msra.mxu0 %v92
    %254 = vmatprep.subr.mxu0 0.0
    %255 = vmatpush1.msra.mxu0 %v95
    %256 = vmatprep.subr.mxu0 0.0
    %257 = vmatpush1.msra.mxu0 %v98
    %258 = vmatprep.subr.mxu0 0.0
    %259 = vmatpush1.msra.mxu0 %v101
    %260 = vmatprep.subr.mxu0 0.0
    %261 = vmatpush1.msra.mxu0 %v104
    %262 = vmatprep.subr.mxu0 0.0
    %263 = vmatpush1.msra.mxu0 %v107
    %264 = vmatprep.subr.mxu0 0.0
    %265 = vmatpush1.msra.mxu0 %v110
    %266 = vmatprep.subr.mxu0 0.0
    %267 = vmatpush1.msra.mxu0 %v113
    %268 = vmatprep.subr.mxu0 0.0
    %269 = vmatpush1.msra.mxu0 %v116
    %270 = vmatprep.subr.mxu0 0.0
    %271 = vmatpush1.msra.mxu0 %v119
    %272 = vmatprep.subr.mxu0 0.0
    %273 = vmatpush1.msra.mxu0 %v122
    %274 = vmatprep.subr.mxu0 0.0
    %275 = vmatpush1.msra.mxu0 %v125
    %276 = vmatprep.subr.mxu0 0.0
    %277 = vmatpush1.msra.mxu0 %v128
    %278 = vmatprep.subr.mxu0 0.0
    %279 = vmatpush1.msra.mxu0 %v131
    %280 = vmatprep.subr.mxu0 0.0
    %281 = vmatpush1.msra.mxu0 %v134
    %282 = vmatprep.subr.mxu0 0.0
    %283 = vmatpush1.msra.mxu0 %v137
    %284 = vmatprep.subr.mxu0 0.0
    %285 = vmatpush1.msra.mxu0 %v140
    %286 = vmatprep.subr.mxu0 0.0
    %287 = vmatpush1.msra.mxu0 %v143
    %288 = vmatprep.subr.mxu0 0.0
    %289 = vmatpush1.msra.mxu0 %v146
    %290 = vmatprep.subr.mxu0 0.0
    %291 = vmatpush1.msra.mxu0 %v149
    %292 = vmatprep.subr.mxu0 0.0
    %293 = vmatpush1.msra.mxu0 %v152
    %294 = vmatprep.subr.mxu0 0.0
    %295 = vmatpush1.msra.mxu0 %v155
    %296 = vmatprep.subr.mxu0 0.0
    %297 = vmatpush1.msra.mxu0 %v158
    %298 = vmatprep.subr.mxu0 0.0
    %299 = vmatpush1.msra.mxu0 %v161
    %300 = vmatprep.subr.mxu0 0.0
    %301 = vmatpush1.msra.mxu0 %v164
    %302 = vmatprep.subr.mxu0 0.0
    %303 = vmatpush1.msra.mxu0 %v167
    %304 = vmatprep.subr.mxu0 0.0
    %305 = vmatpush1.msra.mxu0 %v170
    %306 = vmatprep.mubr.f32.mxu0 %v74
    %307 = vmatmul.mubr.f32.gmra.mrb[0].mxu0 %v73
    %v308 = vpop.f32.mrb[0].mxu0
    %v309 = vadd.f32 0.0, %v308
    %v310 = vpop.f32.mrb[0].mxu0
    %311 = vdwg.mxu0
    %v312 = vld [vmem:[#allocation2] sm:$0xff]
    %v313 = vld [vmem:[#allocation2 + $0x8] sm:$0xff]
    %v314 = vld [vmem:[#allocation2 + $0x10] sm:$0xff]
    %v315 = vand.u32 2147483647, %v238
    %v316 = vand.u32 2147483647, %v240
    %v317 = vand.u32 2147483647, %v309
    %v318 = vadd.f32 %v312, %v315
    %v319 = vadd.f32 %v313, %v316
    %v320 = vadd.f32 %v314, %v317
    %321 = vst [vmem:[#allocation2] sm:$0xff] %v318
    %322 = vst [vmem:[#allocation2 + $0x8] sm:$0xff] %v319
    %323 = vst [vmem:[#allocation2 + $0x10] sm:$0xff] %v320
    // Predicated region
    $region30: #{tpu_custom_call.1} parent=1 // pred_check
      %p324 = pneg %p62
    $region31: #{tpu_custom_call.1} parent=1 // pred_check_branch
      %326 = sbr.rel (%p324) target = $region33
    $region32: #{tpu_custom_call.1} parent=1 // pred_region
      %v327 = vld [vmem:[#allocation2] sm:$0xff]
      %v328 = vld [vmem:[#allocation2 + $0x8] sm:$0xff]
      %v329 = vld [vmem:[#allocation2 + $0x10] sm:$0xff]
      %v330 = vadd.f32 %v327, %v328
      %v331 = vadd.f32 %v330, %v329
      %332 = vadd.xlane.f32.xlu0 %v331
      %v333 = vpop.xlane.xlu0 %332
      %v334 = vrot.slane %v333, 4
      %v335 = vadd.f32 %v333, %v334
      %v336 = vrot.slane %v335, 2
      %v337 = vadd.f32 %v335, %v336
      %v338 = vrot.slane %v337, 1
      %v339 = vadd.f32 %v337, %v338
      %s340 = vtos %v339
      %s341 = scalar_lea.smem [#allocation9], 0
      %342 = sst [smem:[%s341]] %s340
    $region33: #{tpu_custom_call.1} parent=1 // pred_fallthru
      _
    // Predicated region
    $region34: #{tpu_custom_call.1} parent=1 // pred_check
      _
    $region35: #{tpu_custom_call.1} parent=1 // pred_check_branch
      %344 = sbr.rel (0) target = $region37
    $region36: #{tpu_custom_call.1} parent=1 // pred_region
      %s346 = ssub.s32 16, 16
      %347 = vsyncadd [#allocation5], %s346
      %350 = dma.smem_to_hbm [#allocation9], 16, %s3, [#allocation5]
    $region37: #{tpu_custom_call.1} parent=1 // pred_fallthru
      _
    // Predicated region
    $region38: #{tpu_custom_call.1} parent=1 // pred_check
      _
    $region39: #{tpu_custom_call.1} parent=1 // pred_check_branch
      %352 = sbr.rel (0) target = $region41
    $region40: #{tpu_custom_call.1} parent=1 // pred_region
      %353 = dma.done [#allocation5], 16
    $region41: #{tpu_custom_call.1} parent=1 // pred_fallthru
      _
    %354 = sfence
    %355 = vsyncpa [#allocation4], 1
    %356 = vsyncpa [#allocation7], 1
    %357 = vsyncpa [#allocation5], 1

</llo_original>
